<compile_context>
chip_gen: v5e
topology: v5e:2x2
jax: 0.10.0
libtpu: 0.0.40
codegen_flags: <defaults>
</compile_context>

<pallas_src>
import math
import numpy as np
import jax
import jax.numpy as jnp
from jax.experimental import pallas as pl
from jax.experimental.pallas import tpu as pltpu

WINDOW_SIZE = 11
SIGMA = 1.5


def _round_up(x, m):
    return (x + m - 1) // m * m


def _gaussian_1d(window_size, sigma):
    g = np.array(
        [math.exp(-((x - window_size // 2) ** 2) / float(2 * sigma ** 2))
         for x in range(window_size)],
        dtype=np.float64,
    )
    return (g / g.sum()).astype(np.float32)


def _banded_matrices(window_size, C, H, W, blockdiag):
    """Banded matrices implementing the VALID separable Gaussian blur as matmuls.

    Horizontal blur:  T = X(C*H, W) @ Gw(W, wout_pad)
    Vertical blur  :  M = Gh @ T, where Gh is (hout_pad, H) (per-channel path)
                      or block-diagonal (C*hout_pad, C*H) (all channels fused).
    wout_pad / hout_pad are lane/sublane-aligned; the padding columns/rows are
    zero (so the padded SSIM map evaluates to 1 and must be masked at the end).
    """
    g = _gaussian_1d(window_size, SIGMA)
    hout = H - window_size + 1
    wout = W - window_size + 1
    hout_pad = _round_up(hout, 8)
    wout_pad = _round_up(wout, 128)

    Gw = np.zeros((W, wout_pad), np.float32)
    for j in range(wout):
        Gw[j:j + window_size, j] = g
    Gh = np.zeros((hout_pad, H), np.float32)
    for i in range(hout):
        Gh[i, i:i + window_size] = g
    if blockdiag:
        Gh_bd = np.zeros((C * hout_pad, C * H), np.float32)
        for c in range(C):
            Gh_bd[c * hout_pad:(c + 1) * hout_pad, c * H:(c + 1) * H] = Gh
        Gh = Gh_bd
    return jnp.asarray(Gw), jnp.asarray(Gh), hout, wout, hout_pad, wout_pad


def _make_ssim_kernel(Bblk, C, H, W, hout, wout, hout_pad, wout_pad, c1, c2,
                      blockdiag, matmul_dtype):
    CH = C * H
    inv_n = 1.0 / float(C * hout * wout)

    def _ssim_map(mu1, mu2, e11, e22, e12):
        mu1_sq = mu1 * mu1
        mu2_sq = mu2 * mu2
        mu1_mu2 = mu1 * mu2
        sigma1_sq = e11 - mu1_sq
        sigma2_sq = e22 - mu2_sq
        sigma12 = e12 - mu1_mu2
        v1 = 2.0 * sigma12 + c2
        v2 = sigma1_sq + sigma2_sq + c2
        num = (2.0 * mu1_mu2 + c1) * v1
        den = (mu1_sq + mu2_sq + c1) * v2
        # divide -> EUP reciprocal + VPU multiply (frees VALU slots).
        return num * pl.reciprocal(den, approx=False)

    def kernel(gw_ref, gh_ref, img1_ref, img2_ref, out_ref):
        gw = gw_ref[...].astype(matmul_dtype)   # (W, wout_pad)
        gh = gh_ref[...].astype(matmul_dtype)   # (hout_pad, H) or (C*hout_pad, C*H)

        for b in range(Bblk):                   # static, fully unrolled
            x1 = img1_ref[b].astype(jnp.float32)   # (C*H, W)
            x2 = img2_ref[b].astype(jnp.float32)

            # All 5 planes stacked along sublanes -> ONE horizontal-blur matmul
            # (shared RHS Gw is pushed into the MXU weight registers once).
            stacked = jnp.concatenate([x1, x2, x1 * x1, x2 * x2, x1 * x2], axis=0)
            t_all = jnp.dot(stacked.astype(matmul_dtype), gw,
                            preferred_element_type=jnp.float32)   # (5*C*H, wout_pad)

            if blockdiag:
                # 5 fat vertical-blur matmuls, each covering all channels.
                def vconv(p):
                    sl = t_all[p * CH:(p + 1) * CH, :]
                    return jnp.dot(gh, sl.astype(matmul_dtype),
                                   preferred_element_type=jnp.float32)

                smap = _ssim_map(vconv(0), vconv(1), vconv(2), vconv(3), vconv(4))
                rows = jax.lax.broadcasted_iota(jnp.int32, smap.shape, 0)
                cols = jax.lax.broadcasted_iota(jnp.int32, smap.shape, 1)
                valid = ((rows % hout_pad) < hout) & (cols < wout)
            else:
                # Per-channel vertical blur; accumulate ssim maps elementwise,
                # reduce cross-lane exactly once per image.
                acc = jnp.zeros((hout_pad, wout_pad), jnp.float32)
                for c in range(C):
                    def vconv(p, c=c):
                        sl = t_all[p * CH + c * H: p * CH + (c + 1) * H, :]
                        return jnp.dot(gh, sl.astype(matmul_dtype),
                                       preferred_element_type=jnp.float32)

                    acc = acc + _ssim_map(vconv(0), vconv(1), vconv(2),
                                          vconv(3), vconv(4))
                smap = acc
                rows = jax.lax.broadcasted_iota(jnp.int32, smap.shape, 0)
                cols = jax.lax.broadcasted_iota(jnp.int32, smap.shape, 1)
                valid = (rows < hout) & (cols < wout)

            # Padded rows/cols evaluate to 1 (mu=sigma=0): mask BEFORE summing.
            mean = jnp.sum(jnp.where(valid, smap, 0.0)) * jnp.float32(inv_n)
            out_ref[b] = jnp.full((8, 128), mean, dtype=out_ref.dtype)

    return kernel


def ssim_pallas(img1, img2, window_size=WINDOW_SIZE, val_range=1.0,
                matmul_dtype=jnp.float32):
    """Equivalent of SSIM(window_size=11, size_average=False, val_range=1).forward.
    Returns shape (B, 1), dtype == img1.dtype.

    matmul_dtype=jnp.bfloat16 halves MXU passes on v5e/v6e but degrades the
    E[x^2]-mu^2 cancellation; default f32 keeps the 1e-4 reference tolerance.
    """
    B, C, H, W = img1.shape
    ws = min(window_size, H, W)              # matches the PyTorch real_size logic
    # Small/medium channel stacks: block-diagonal Gh -> 5 fat vconv matmuls.
    blockdiag = (C * H) <= 512
    Gw, Gh, hout, wout, hout_pad, wout_pad = _banded_matrices(ws, C, H, W, blockdiag)
    L = float(val_range)
    c1 = (0.01 * L) ** 2
    c2 = (0.03 * L) ** 2

    CH = C * H
    map_rows = C * hout_pad if blockdiag else hout_pad

    # ---- batch block: amortize ~0.35us grid-step cost for tiny images, but
    # ---- keep >=2 grid steps (v7x has 2 TCs) and bound the VMEM working set.
    per_image_tmp_bytes = 4 * (5 * CH * W + 5 * CH * wout_pad
                               + 12 * map_rows * wout_pad)
    per_image_in_bytes = 4 * 4 * CH * W        # img1+img2, double-buffered blocks
    per_image_bytes = per_image_tmp_bytes + per_image_in_bytes
    per_image_macs = (5 * CH * W * wout_pad
                      + 5 * map_rows * (CH if blockdiag else H) * wout_pad)
    target_macs = 4 * 1024 * 1024
    vmem_budget = 24 * 1024 * 1024
    bblk = min(B,
               max(1, vmem_budget // max(per_image_bytes, 1)),
               max(1, target_macs // max(per_image_macs, 1)))
    if B >= 2:
        bblk = min(bblk, B // 2)
    bblk = max(1, int(bblk))
    while B % bblk:
        bblk -= 1

    # ---- scoped-VMEM limit from the actual working set (default is 16-32 MiB),
    # ---- capped below physical VMEM (64 MiB on v7x, 128 MiB on v5e/v6e).
    const_bytes = 4 * 2 * (int(Gw.size) + int(Gh.size))
    need = bblk * per_image_bytes + const_bytes + 2 * bblk * 8 * 128 * 4
    try:
        phys = int(pltpu.get_tpu_info().vmem_capacity_bytes)
    except Exception:
        phys = 64 * 1024 * 1024
    vmem_limit = int(min(max(int(need * 1.5), 32 * 1024 * 1024), int(phys * 0.9)))

    # Lane-dense rank-3 view: (B, C*H, W) keeps W on the lane axis and merges
    # all channels into the sublane axis of a single 2-D tile.
    a = img1.reshape(B, CH, W)
    b = img2.reshape(B, CH, W)

    kernel = _make_ssim_kernel(bblk, C, H, W, hout, wout, hout_pad, wout_pad,
                               c1, c2, blockdiag, matmul_dtype)

    # Output stored as a lane-dense (B, 8, 128) slab; only [:, 0, 0] is meaningful.
    out_padded = pl.pallas_call(
        kernel,
        out_shape=jax.ShapeDtypeStruct((B, 8, 128), jnp.float32),
        grid_spec=pltpu.PrefetchScalarGridSpec(
            num_scalar_prefetch=0,
            grid=(B // bblk,),
            in_specs=[
                pl.BlockSpec(Gw.shape, lambda i: (0, 0)),            # Gw (constant)
                pl.BlockSpec(Gh.shape, lambda i: (0, 0)),            # Gh (constant)
                pl.BlockSpec((bblk, CH, W), lambda i: (i, 0, 0)),    # img1
                pl.BlockSpec((bblk, CH, W), lambda i: (i, 0, 0)),    # img2
            ],
            out_specs=pl.BlockSpec((bblk, 8, 128), lambda i: (i, 0, 0)),
        ),
        compiler_params=pltpu.CompilerParams(
            dimension_semantics=("parallel",),
            vmem_limit_bytes=vmem_limit),
    )(Gw, Gh, a, b)

    ret = out_padded[:, 0, 0]                 # (B,)
    return ret.reshape(-1, 1).astype(img1.dtype)


def _ssim_ref(img1, img2, window_size=WINDOW_SIZE, val_range=1.0):
    """Pure-JAX reference mirroring the PyTorch code (sanity check)."""
    B, C, H, W = img1.shape
    ws = min(window_size, H, W)
    g = _gaussian_1d(ws, SIGMA)
    w2 = np.outer(g, g).astype(np.float32)
    window = jnp.asarray(np.broadcast_to(w2, (C, 1, ws, ws)).copy())

    def conv(x):
        return jax.lax.conv_general_dilated(
            x.astype(jnp.float32), window, window_strides=(1, 1), padding="VALID",
            dimension_numbers=("NCHW", "OIHW", "NCHW"), feature_group_count=C)

    L = float(val_range)
    c1 = (0.01 * L) ** 2
    c2 = (0.03 * L) ** 2
    mu1, mu2 = conv(img1), conv(img2)
    mu1_sq, mu2_sq, mu1_mu2 = mu1 * mu1, mu2 * mu2, mu1 * mu2
    sigma1_sq = conv(img1 * img1) - mu1_sq
    sigma2_sq = conv(img2 * img2) - mu2_sq
    sigma12 = conv(img1 * img2) - mu1_mu2
    v1 = 2.0 * sigma12 + c2
    v2 = sigma1_sq + sigma2_sq + c2
    ssim_map = (2 * mu1_mu2 + c1) * v1 / ((mu1_sq + mu2_sq + c1) * v2)
    ret = ssim_map.mean(axis=1).mean(axis=1).mean(axis=1)   # size_average=False
    return ret.reshape(-1, 1)


if __name__ == "__main__":
    B, C, H, W = 2, 4, 16, 16
    key = jax.random.PRNGKey(0)
    k1, k2 = jax.random.split(key)
    img1 = jax.random.uniform(k1, (B, C, H, W), dtype=jnp.float32)
    img2 = jnp.clip(img1 + 0.05 * jax.random.normal(k2, (B, C, H, W), dtype=jnp.float32),
                    0.0, 1.0)

    out = jax.block_until_ready(ssim_pallas(img1, img2))
    ref = jax.block_until_ready(_ssim_ref(img1, img2))

    assert out.shape == (B, 1)
    np.testing.assert_allclose(np.asarray(out), np.asarray(ref), rtol=2e-4, atol=1e-5)
    print("KERNEL_OK")
</pallas_src>

<mosaic_0001>
module attributes {stable_mosaic.version = 11 : i64} {
  func.func @kernel(%arg0: i32, %arg1: memref<16x128xf32, #tpu.memory_space<vmem>>, %arg2: memref<32x64xf32, #tpu.memory_space<vmem>>, %arg3: memref<1x64x16xf32, #tpu.memory_space<vmem>>, %arg4: memref<1x64x16xf32, #tpu.memory_space<vmem>>, %arg5: memref<1x8x128xf32, #tpu.memory_space<vmem>>) attributes {dimension_semantics = [#tpu.dimension_semantics<parallel>], iteration_bounds = array<i64: 2>, scalar_prefetch = 0 : i64, scratch_operands = 0 : i64, tpu.core_type = #tpu.core_type<tc>, window_params = [{pipeline_mode = #tpu.pipeline_mode<synchronous>, transform_indices = @transform_0, window_bounds = array<i64: 16, 128>}, {pipeline_mode = #tpu.pipeline_mode<synchronous>, transform_indices = @transform_1, window_bounds = array<i64: 32, 64>}, {transform_indices = @transform_2, window_bounds = array<i64: 1, 64, 16>}, {transform_indices = @transform_3, window_bounds = array<i64: 1, 64, 16>}, {transform_indices = @transform_4, window_bounds = array<i64: 1, 8, 128>}]} {
    %c0 = arith.constant 0 : index
    %c0_0 = arith.constant 0 : index
    %0 = vector.load %arg1[%c0, %c0_0] : memref<16x128xf32, #tpu.memory_space<vmem>>, vector<16x128xf32>
    %c0_1 = arith.constant 0 : index
    %c0_2 = arith.constant 0 : index
    %1 = vector.load %arg2[%c0_1, %c0_2] : memref<32x64xf32, #tpu.memory_space<vmem>>, vector<32x64xf32>
    %c0_3 = arith.constant 0 : index
    %c0_4 = arith.constant 0 : index
    %c0_5 = arith.constant 0 : index
    %2 = vector.load %arg3[%c0_3, %c0_4, %c0_5] : memref<1x64x16xf32, #tpu.memory_space<vmem>>, vector<1x64x16xf32>
    %3 = vector.shape_cast %2 : vector<1x64x16xf32> to vector<64x16xf32>
    %c0_6 = arith.constant 0 : index
    %c0_7 = arith.constant 0 : index
    %c0_8 = arith.constant 0 : index
    %4 = vector.load %arg4[%c0_6, %c0_7, %c0_8] : memref<1x64x16xf32, #tpu.memory_space<vmem>>, vector<1x64x16xf32>
    %5 = vector.shape_cast %4 : vector<1x64x16xf32> to vector<64x16xf32>
    %6 = arith.mulf %3, %3 : vector<64x16xf32>
    %7 = arith.mulf %5, %5 : vector<64x16xf32>
    %8 = arith.mulf %3, %5 : vector<64x16xf32>
    %9 = tpu.concatenate %3, %5, %6, %7, %8 in 0 : vector<64x16xf32>, vector<64x16xf32>, vector<64x16xf32>, vector<64x16xf32>, vector<64x16xf32> -> vector<320x16xf32>
    %cst = arith.constant dense<0.000000e+00> : vector<320x128xf32>
    %10 = tpu.matmul %9, %0, %cst {dimension_numbers = #tpu.dot_dimension_numbers<[1], [0], [0], [1], [0, 0, 1, 1], [], []>} : vector<320x16xf32>, vector<16x128xf32>, vector<320x128xf32> -> vector<320x128xf32>
    %11 = vector.extract_strided_slice %10 {offsets = [0, 0], sizes = [64, 128], strides = [1, 1]} : vector<320x128xf32> to vector<64x128xf32>
    %cst_9 = arith.constant dense<0.000000e+00> : vector<32x128xf32>
    %12 = tpu.matmul %1, %11, %cst_9 {dimension_numbers = #tpu.dot_dimension_numbers<[1], [0], [0], [1], [0, 0, 1, 1], [], []>} : vector<32x64xf32>, vector<64x128xf32>, vector<32x128xf32> -> vector<32x128xf32>
    %13 = vector.extract_strided_slice %10 {offsets = [64, 0], sizes = [64, 128], strides = [1, 1]} : vector<320x128xf32> to vector<64x128xf32>
    %cst_10 = arith.constant dense<0.000000e+00> : vector<32x128xf32>
    %14 = tpu.matmul %1, %13, %cst_10 {dimension_numbers = #tpu.dot_dimension_numbers<[1], [0], [0], [1], [0, 0, 1, 1], [], []>} : vector<32x64xf32>, vector<64x128xf32>, vector<32x128xf32> -> vector<32x128xf32>
    %15 = vector.extract_strided_slice %10 {offsets = [128, 0], sizes = [64, 128], strides = [1, 1]} : vector<320x128xf32> to vector<64x128xf32>
    %cst_11 = arith.constant dense<0.000000e+00> : vector<32x128xf32>
    %16 = tpu.matmul %1, %15, %cst_11 {dimension_numbers = #tpu.dot_dimension_numbers<[1], [0], [0], [1], [0, 0, 1, 1], [], []>} : vector<32x64xf32>, vector<64x128xf32>, vector<32x128xf32> -> vector<32x128xf32>
    %17 = vector.extract_strided_slice %10 {offsets = [192, 0], sizes = [64, 128], strides = [1, 1]} : vector<320x128xf32> to vector<64x128xf32>
    %cst_12 = arith.constant dense<0.000000e+00> : vector<32x128xf32>
    %18 = tpu.matmul %1, %17, %cst_12 {dimension_numbers = #tpu.dot_dimension_numbers<[1], [0], [0], [1], [0, 0, 1, 1], [], []>} : vector<32x64xf32>, vector<64x128xf32>, vector<32x128xf32> -> vector<32x128xf32>
    %19 = vector.extract_strided_slice %10 {offsets = [256, 0], sizes = [64, 128], strides = [1, 1]} : vector<320x128xf32> to vector<64x128xf32>
    %cst_13 = arith.constant dense<0.000000e+00> : vector<32x128xf32>
    %20 = tpu.matmul %1, %19, %cst_13 {dimension_numbers = #tpu.dot_dimension_numbers<[1], [0], [0], [1], [0, 0, 1, 1], [], []>} : vector<32x64xf32>, vector<64x128xf32>, vector<32x128xf32> -> vector<32x128xf32>
    %21 = arith.mulf %12, %12 : vector<32x128xf32>
    %22 = arith.mulf %14, %14 : vector<32x128xf32>
    %23 = arith.mulf %12, %14 : vector<32x128xf32>
    %24 = arith.subf %16, %21 : vector<32x128xf32>
    %25 = arith.subf %18, %22 : vector<32x128xf32>
    %26 = arith.subf %20, %23 : vector<32x128xf32>
    %cst_14 = arith.constant 2.000000e+00 : f32
    %27 = vector.broadcast %cst_14 : f32 to vector<32x128xf32>
    %28 = arith.mulf %27, %26 : vector<32x128xf32>
    %cst_15 = arith.constant 8.99999984E-4 : f32
    %29 = vector.broadcast %cst_15 : f32 to vector<32x128xf32>
    %30 = arith.addf %28, %29 : vector<32x128xf32>
    %31 = arith.addf %24, %25 : vector<32x128xf32>
    %cst_16 = arith.constant 8.99999984E-4 : f32
    %32 = vector.broadcast %cst_16 : f32 to vector<32x128xf32>
    %33 = arith.addf %31, %32 : vector<32x128xf32>
    %cst_17 = arith.constant 2.000000e+00 : f32
    %34 = vector.broadcast %cst_17 : f32 to vector<32x128xf32>
    %35 = arith.mulf %34, %23 : vector<32x128xf32>
    %cst_18 = arith.constant 9.99999974E-5 : f32
    %36 = vector.broadcast %cst_18 : f32 to vector<32x128xf32>
    %37 = arith.addf %35, %36 : vector<32x128xf32>
    %38 = arith.mulf %37, %30 : vector<32x128xf32>
    %39 = arith.addf %21, %22 : vector<32x128xf32>
    %cst_19 = arith.constant 9.99999974E-5 : f32
    %40 = vector.broadcast %cst_19 : f32 to vector<32x128xf32>
    %41 = arith.addf %39, %40 : vector<32x128xf32>
    %42 = arith.mulf %41, %33 : vector<32x128xf32>
    %43 = tpu.reciprocal %42 : vector<32x128xf32> -> vector<32x128xf32>
    %44 = arith.mulf %38, %43 : vector<32x128xf32>
    %45 = tpu.iota {dimensions = array<i32: 0>} : vector<32x128xi32>
    %46 = tpu.iota {dimensions = array<i32: 1>} : vector<32x128xi32>
    %c8_i32 = arith.constant 8 : i32
    %c0_i32 = arith.constant 0 : i32
    %47 = arith.cmpi eq, %c8_i32, %c0_i32 : i32
    %c1_i32 = arith.constant 1 : i32
    %48 = arith.select %47, %c1_i32, %c8_i32 : i32
    %49 = vector.broadcast %48 : i32 to vector<32x128xi32>
    %50 = arith.remsi %45, %49 : vector<32x128xi32>
    %c0_i32_20 = arith.constant 0 : i32
    %51 = vector.broadcast %c0_i32_20 : i32 to vector<32x128xi32>
    %52 = arith.cmpi ne, %50, %51 : vector<32x128xi32>
    %c0_i32_21 = arith.constant 0 : i32
    %53 = vector.broadcast %c0_i32_21 : i32 to vector<32x128xi32>
    %54 = arith.cmpi slt, %50, %53 : vector<32x128xi32>
    %c0_i32_22 = arith.constant 0 : i32
    %55 = arith.cmpi slt, %48, %c0_i32_22 : i32
    %56 = vector.broadcast %55 : i1 to vector<32x128xi1>
    %57 = vector.broadcast %56 : vector<32x128xi1> to vector<32x128xi1>
    %58 = arith.xori %54, %57 : vector<32x128xi1>
    %59 = arith.andi %58, %52 : vector<32x128xi1>
    %60 = vector.broadcast %48 : i32 to vector<32x128xi32>
    %61 = arith.addi %50, %60 : vector<32x128xi32>
    %62 = arith.select %59, %61, %50 : vector<32x128xi1>, vector<32x128xi32>
    %c6_i32 = arith.constant 6 : i32
    %63 = vector.broadcast %c6_i32 : i32 to vector<32x128xi32>
    %64 = arith.cmpi slt, %62, %63 : vector<32x128xi32>
    %c6_i32_23 = arith.constant 6 : i32
    %65 = vector.broadcast %c6_i32_23 : i32 to vector<32x128xi32>
    %66 = arith.cmpi slt, %46, %65 : vector<32x128xi32>
    %67 = arith.andi %64, %66 : vector<32x128xi1>
    %cst_24 = arith.constant 0.000000e+00 : f32
    %68 = vector.broadcast %cst_24 : f32 to vector<32x128xf32>
    %69 = arith.select %67, %44, %68 : vector<32x128xi1>, vector<32x128xf32>
    %70 = vector.shape_cast %69 : vector<32x128xf32> to vector<1x32x128xf32>
    %cst_25 = arith.constant dense<0.000000e+00> : vector<1xf32>
    %71 = vector.multi_reduction <add>, %70, %cst_25 [1, 2] : vector<1x32x128xf32> to vector<1xf32>
    %72 = vector.shape_cast %71 : vector<1xf32> to vector<1x1x1xf32>
    %73 = vector.extract %72[0, 0, 0] : f32 from vector<1x1x1xf32>
    %cst_26 = arith.constant 0.0069444445 : f32
    %74 = arith.mulf %73, %cst_26 : f32
    %75 = vector.broadcast %74 : f32 to vector<8x128xf32>
    %c0_27 = arith.constant 0 : index
    %c0_28 = arith.constant 0 : index
    %c0_29 = arith.constant 0 : index
    %76 = vector.load %arg5[%c0_27, %c0_28, %c0_29] : memref<1x8x128xf32, #tpu.memory_space<vmem>>, vector<1x8x128xf32>
    %77 = vector.shape_cast %76 : vector<1x8x128xf32> to vector<8x128xf32>
    %78 = vector.shape_cast %75 : vector<8x128xf32> to vector<1x8x128xf32>
    tpu.vector_store %arg5[%c0_27, %c0_28, %c0_29], %78 {strides = array<i32>} : memref<1x8x128xf32, #tpu.memory_space<vmem>>, vector<1x8x128xf32>,
    return
  }
  func.func @transform_0(%arg0: i32) -> (i32, i32) {
    %c0_i32 = arith.constant 0 : i32
    %c0_i32_0 = arith.constant 0 : i32
    %c0_i32_1 = arith.constant 0 : i32
    return %c0_i32, %c0_i32_0 : i32, i32
  }
  func.func @transform_1(%arg0: i32) -> (i32, i32) {
    %c0_i32 = arith.constant 0 : i32
    %c0_i32_0 = arith.constant 0 : i32
    %c0_i32_1 = arith.constant 0 : i32
    return %c0_i32, %c0_i32_0 : i32, i32
  }
  func.func @transform_2(%arg0: i32) -> (i32, i32, i32) {
    %c0_i32 = arith.constant 0 : i32
    %c0_i32_0 = arith.constant 0 : i32
    %c0_i32_1 = arith.constant 0 : i32
    return %arg0, %c0_i32, %c0_i32_0 : i32, i32, i32
  }
  func.func @transform_3(%arg0: i32) -> (i32, i32, i32) {
    %c0_i32 = arith.constant 0 : i32
    %c0_i32_0 = arith.constant 0 : i32
    %c0_i32_1 = arith.constant 0 : i32
    return %arg0, %c0_i32, %c0_i32_0 : i32, i32, i32
  }
  func.func @transform_4(%arg0: i32) -> (i32, i32, i32) {
    %c0_i32 = arith.constant 0 : i32
    %c0_i32_0 = arith.constant 0 : i32
    %c0_i32_1 = arith.constant 0 : i32
    return %arg0, %c0_i32, %c0_i32_0 : i32, i32, i32
  }
}

</mosaic_0001>

<llo_original>
// kernel: tpu_custom_call.1
$region0: #{tpu_custom_call.1}
  #allocation0 [shape = 'u32[]', space=smem, size = 0x4, offset = 0x4, fixed_abs, tag = 'smem constant byte address 0x4 - core index']
  #allocation1 [shape = 'u32[72,128]{1,0:T(1,128)}', space=vmem, size = 0x9000, scoped, tag = 'internal scratch']
  %s0 = inlined_call_operand.vmem [shape: f32[16,128], index: 0, kind: input, shape index: {}]
  %s1 = inlined_call_operand.vmem [shape: f32[32,64], index: 1, kind: input, shape index: {}]
  %s2 = inlined_call_operand.vmem [shape: f32[2,64,16], index: 2, kind: input, shape index: {}]
  %s3 = inlined_call_operand.vmem [shape: f32[2,64,16], index: 3, kind: input, shape index: {}]
  %s4 = inlined_call_operand.hbm [shape: f32[2,8,128], index: 4, kind: output, shape index: {}]
  %s5 = sld [smem:[#allocation0]]
  $region49: #{tpu_custom_call.1} parent=0
    _
  %s7 = ssub.s32 1, %s5
  %s8 = scalar_select 0, %s7, %s5
  $region1: #{tpu_custom_call.1} parent=0
    #allocation2 [shape = 'u8[8192]{0}', space=vmem, size = 0x2000, scoped, tag = 'output window, operand 0']
    #allocation3 [shape = 's32[2]{0}', space=sflag, size = 0x8, scoped, tag = 'scoped memory for tpu_custom_call.1']
    %9 = vsyncpa [#allocation3], 0
    %s10 = scalar_lea.sflag [#allocation3], 1
    %11 = vsyncpa %s10, 0
    loop: start=0, step=1, limit=4
    $region2: #{tpu_custom_call.1} parent=1 // loop_pre_header
      _
    $region3: #{tpu_custom_call.1} parent=1 // loop_header
      %s13 = sphi 0, %s17
      %p14 = scmp.ge.s32.totalorder %s13, 4
      %s21 = sphi 0, %s21
      %s23 = sphi 0, %s21
      %s24 = sphi 0, %s23
      %s38 = sphi 0, %s24
      %s42 = sphi 0, %s42
      %s44 = sphi 0, %s42
      %s45 = sphi 0, %s44
      %s59 = sphi 0, %s45
      %s65 = sphi 0, %s67
      %s68 = sphi 0, %s65
      %s69 = sphi 0, %s68
      %s85 = sphi 0, %s69
      %s91 = sphi 0, %s93
      %s94 = sphi 0, %s91
      %s95 = sphi 0, %s94
      %s111 = sphi 0, %s95
      %s117 = sphi 0, %s119
      %s120 = sphi 0, %s117
      %s121 = sphi 0, %s120
      %s137 = sphi 0, %s121
    $region4: #{tpu_custom_call.1} parent=1 // loop_header_branch
      %16 = sbr.rel (%p14) target = $region8
    $region5: #{tpu_custom_call.1} parent=1 // loop_body
      %s18 = ssub.s32 %s13, 1
      %s19 = ssub.s32 %s13, 2
      %s20 = sadd.s32 %s13, 1
      %s22 = sadd.s32 %s21, 1
      %p25 = scmp.eq.s32.totalorder %s13, 1
      %p26 = scmp.ne.s32.totalorder %s21, %s23
      %p27 = scmp.eq.s32.totalorder %s13, 0
      %p28 = por %p26, %p27
      %p29 = scmp.ne.s32.totalorder %s21, %s23
      %p30 = scmp.eq.s32.totalorder %s18, 1
      %p31 = por %p29, %p30
      %p32 = scmp.ne.s32.totalorder %s23, %s24
      %p33 = scmp.eq.s32.totalorder %s18, 0
      %p34 = por %p32, %p33
      %p35 = scmp.ne.s32.totalorder %s23, %s24
      %p36 = scmp.eq.s32.totalorder %s19, 1
      %p37 = por %p35, %p36
      %p39 = scmp.ne.s32.totalorder %s24, %s38
      %p40 = scmp.eq.s32.totalorder %s19, 0
      %p41 = por %p39, %p40
      %s43 = sadd.s32 %s42, 1
      %p46 = scmp.eq.s32.totalorder %s13, 1
      %p47 = scmp.ne.s32.totalorder %s42, %s44
      %p48 = scmp.eq.s32.totalorder %s13, 0
      %p49 = por %p47, %p48
      %p50 = scmp.ne.s32.totalorder %s42, %s44
      %p51 = scmp.eq.s32.totalorder %s18, 1
      %p52 = por %p50, %p51
      %p53 = scmp.ne.s32.totalorder %s44, %s45
      %p54 = scmp.eq.s32.totalorder %s18, 0
      %p55 = por %p53, %p54
      %p56 = scmp.ne.s32.totalorder %s44, %s45
      %p57 = scmp.eq.s32.totalorder %s19, 1
      %p58 = por %p56, %p57
      %p60 = scmp.ne.s32.totalorder %s45, %s59
      %p61 = scmp.eq.s32.totalorder %s19, 0
      %p62 = por %p60, %p61
      %s63 = ssub.s32 %s13, %s20
      %p64 = scmp.eq.s32.totalorder %s63, 0
      %s66 = sadd.s32 %s65, 1
      %s67 = scalar_select %p64, %s65, %s66
      %p70 = pneg %p64
      %p71 = scmp.eq.s32.totalorder %s13, 1
      %p72 = por %p70, %p71
      %p73 = scmp.ne.s32.totalorder %s65, %s68
      %p74 = scmp.eq.s32.totalorder %s13, 0
      %p75 = por %p73, %p74
      %p76 = scmp.ne.s32.totalorder %s65, %s68
      %p77 = scmp.eq.s32.totalorder %s18, 1
      %p78 = por %p76, %p77
      %p79 = scmp.ne.s32.totalorder %s68, %s69
      %p80 = scmp.eq.s32.totalorder %s18, 0
      %p81 = por %p79, %p80
      %p82 = scmp.ne.s32.totalorder %s68, %s69
      %p83 = scmp.eq.s32.totalorder %s19, 1
      %p84 = por %p82, %p83
      %p86 = scmp.ne.s32.totalorder %s69, %s85
      %p87 = scmp.eq.s32.totalorder %s19, 0
      %p88 = por %p86, %p87
      %s89 = ssub.s32 %s13, %s20
      %p90 = scmp.eq.s32.totalorder %s89, 0
      %s92 = sadd.s32 %s91, 1
      %s93 = scalar_select %p90, %s91, %s92
      %p96 = pneg %p90
      %p97 = scmp.eq.s32.totalorder %s13, 1
      %p98 = por %p96, %p97
      %p99 = scmp.ne.s32.totalorder %s91, %s94
      %p100 = scmp.eq.s32.totalorder %s13, 0
      %p101 = por %p99, %p100
      %p102 = scmp.ne.s32.totalorder %s91, %s94
      %p103 = scmp.eq.s32.totalorder %s18, 1
      %p104 = por %p102, %p103
      %p105 = scmp.ne.s32.totalorder %s94, %s95
      %p106 = scmp.eq.s32.totalorder %s18, 0
      %p107 = por %p105, %p106
      %p108 = scmp.ne.s32.totalorder %s94, %s95
      %p109 = scmp.eq.s32.totalorder %s19, 1
      %p110 = por %p108, %p109
      %p112 = scmp.ne.s32.totalorder %s95, %s111
      %p113 = scmp.eq.s32.totalorder %s19, 0
      %p114 = por %p112, %p113
      %s115 = ssub.s32 %s13, %s20
      %p116 = scmp.eq.s32.totalorder %s115, 0
      %s118 = sadd.s32 %s117, 1
      %s119 = scalar_select %p116, %s117, %s118
      %p122 = pneg %p116
      %p123 = scmp.eq.s32.totalorder %s13, 1
      %p124 = por %p122, %p123
      %p125 = scmp.ne.s32.totalorder %s117, %s120
      %p126 = scmp.eq.s32.totalorder %s13, 0
      %p127 = por %p125, %p126
      %p128 = scmp.ne.s32.totalorder %s117, %s120
      %p129 = scmp.eq.s32.totalorder %s18, 1
      %p130 = por %p128, %p129
      %p131 = scmp.ne.s32.totalorder %s120, %s121
      %p132 = scmp.eq.s32.totalorder %s18, 0
      %p133 = por %p131, %p132
      %p134 = scmp.ne.s32.totalorder %s120, %s121
      %p135 = scmp.eq.s32.totalorder %s19, 1
      %p136 = por %p134, %p135
      %p138 = scmp.ne.s32.totalorder %s121, %s137
      %p139 = scmp.eq.s32.totalorder %s19, 0
      %p140 = por %p138, %p139
      %p141 = scmp.le.s32.totalorder 1, %s13
      %p142 = scmp.lt.s32.totalorder %s13, 3
      %p143 = pnand %p141, %p142
      %p144 = pneg %p143
      // Predicated region
      $region9: #{tpu_custom_call.1} parent=5 // pred_check
        _
      $region10: #{tpu_custom_call.1} parent=5 // pred_check_branch
        %146 = sbr.rel (%p143) target = $region12
      $region11: #{tpu_custom_call.1} parent=5 // pred_region
        %s147 = ssub.s32 %s13, 1
        // Predicated region
        $region13: #{tpu_custom_call.1} parent=11 // pred_check
          %p148 = pneg %p34
        $region14: #{tpu_custom_call.1} parent=11 // pred_check_branch
          %150 = sbr.rel (%p148) target = $region16
        $region15: #{tpu_custom_call.1} parent=11 // pred_region
          _
        $region16: #{tpu_custom_call.1} parent=11 // pred_fallthru
          _
        // Predicated region
        $region17: #{tpu_custom_call.1} parent=11 // pred_check
          %p151 = pneg %p55
        $region18: #{tpu_custom_call.1} parent=11 // pred_check_branch
          %153 = sbr.rel (%p151) target = $region20
        $region19: #{tpu_custom_call.1} parent=11 // pred_region
          _
        $region20: #{tpu_custom_call.1} parent=11 // pred_fallthru
          _
      $region12: #{tpu_custom_call.1} parent=5 // pred_fallthru
        _
      %p154 = scmp.lt.s32.totalorder %s13, 2
      // Predicated region
      $region21: #{tpu_custom_call.1} parent=5 // pred_check
        %p155 = pneg %p154
      $region22: #{tpu_custom_call.1} parent=5 // pred_check_branch
        %157 = sbr.rel (%p155) target = $region24
      $region23: #{tpu_custom_call.1} parent=5 // pred_region
        // Predicated region
        $region25: #{tpu_custom_call.1} parent=23 // pred_check
          %p158 = pneg %p75
        $region26: #{tpu_custom_call.1} parent=23 // pred_check_branch
          %160 = sbr.rel (%p158) target = $region28
        $region27: #{tpu_custom_call.1} parent=23 // pred_region
          %p161 = scmp.lt.s32.totalorder %s13, 1
          %s162 = scalar_select %p161, %s13, 1
          %s163 = smul.addr %s162, 8
          %s164 = smul.addr %s163, 8
          %s165 = scalar_lea.vmem %s2, %s164
        $region28: #{tpu_custom_call.1} parent=23 // pred_fallthru
          _
        // Predicated region
        $region29: #{tpu_custom_call.1} parent=23 // pred_check
          %p166 = pneg %p101
        $region30: #{tpu_custom_call.1} parent=23 // pred_check_branch
          %168 = sbr.rel (%p166) target = $region32
        $region31: #{tpu_custom_call.1} parent=23 // pred_region
          %p169 = scmp.lt.s32.totalorder %s13, 1
          %s170 = scalar_select %p169, %s13, 1
          %s171 = smul.addr %s170, 8
          %s172 = smul.addr %s171, 8
          %s173 = scalar_lea.vmem %s3, %s172
        $region32: #{tpu_custom_call.1} parent=23 // pred_fallthru
          _
      $region24: #{tpu_custom_call.1} parent=5 // pred_fallthru
        _
      %p174 = scmp.le.s32.totalorder 1, %s13
      %p175 = scmp.lt.s32.totalorder %s13, 3
      %p176 = pnand %p174, %p175
      %p177 = pneg %p176
      // Predicated region
      $region33: #{tpu_custom_call.1} parent=5 // pred_check
        _
      $region34: #{tpu_custom_call.1} parent=5 // pred_check_branch
        %179 = sbr.rel (%p176) target = $region36
      $region35: #{tpu_custom_call.1} parent=5 // pred_region
        %s180 = ssub.s32 %s13, 1
        %p181 = pneg %p34
        %p182 = pneg %p31
        %p183 = pneg %p55
        %p184 = pneg %p52
        %p185 = scmp.lt.s32.totalorder %s18, 1
        %s186 = scalar_select %p185, %s18, 1
        %s187 = smul.addr %s186, 8
        %s188 = smul.addr %s187, 8
        %s189 = scalar_lea.vmem %s2, %s188
        %p190 = pneg %p81
        %p191 = pneg %p78
        %p192 = scmp.lt.s32.totalorder %s18, 1
        %s193 = scalar_select %p192, %s18, 1
        %s194 = smul.addr %s193, 8
        %s195 = smul.addr %s194, 8
        %s196 = scalar_lea.vmem %s3, %s195
        %p197 = pneg %p107
        %p198 = pneg %p104
        %p199 = pneg %p133
        %p200 = pneg %p130
        %s201 = sand.u32 %s120, 1
        %s202 = scalar_lea.sflag [#allocation3], %s201
        %s203 = sand.u32 %s120, 1
        %s204 = smul.addr %s203, 8
        %s205 = scalar_lea.vmem [#allocation2], %s204
        %p206 = scmp.lt.s32.totalorder %s18, 1
        %s207 = scalar_select %p206, %s18, 1
        %s208 = smul.addr %s207, 8
        %s209 = smul.addr %s208, 8
        %s210 = scalar_lea.vmem %s2, %s209
        %p211 = scmp.lt.s32.totalorder %s18, 1
        %s212 = scalar_select %p211, %s18, 1
        %s213 = smul.addr %s212, 8
        %s214 = smul.addr %s213, 8
        %s215 = scalar_lea.vmem %s3, %s214
        %v216 = vld [vmem:[%s0] sm:$0xff]
        %v217 = vld [vmem:[%s0 + $0x8] sm:$0xff]
        %v218 = vld [vmem:[%s1] sm:$0xff]
        %v219 = vld [vmem:[%s1 + $0x8] sm:$0xff]
        %v220 = vld [vmem:[%s1 + $0x10] sm:$0xff]
        %v221 = vld [vmem:[%s1 + $0x18] sm:$0xff]
        %v222 = vld [vmem:[%s210] sm:$0xff]
        %v223 = vld [vmem:[%s210 + $0x8] sm:$0xff]
        %v224 = vld [vmem:[%s210 + $0x10] sm:$0xff]
        %v225 = vld [vmem:[%s210 + $0x18] sm:$0xff]
        %v226 = vld [vmem:[%s210 + $0x20] sm:$0xff]
        %v227 = vld [vmem:[%s210 + $0x28] sm:$0xff]
        %v228 = vld [vmem:[%s210 + $0x30] sm:$0xff]
        %v229 = vld [vmem:[%s210 + $0x38] sm:$0xff]
        %v230 = vld [vmem:[%s215] sm:$0xff]
        %v231 = vld [vmem:[%s215 + $0x8] sm:$0xff]
        %v232 = vld [vmem:[%s215 + $0x10] sm:$0xff]
        %v233 = vld [vmem:[%s215 + $0x18] sm:$0xff]
        %v234 = vld [vmem:[%s215 + $0x20] sm:$0xff]
        %v235 = vld [vmem:[%s215 + $0x28] sm:$0xff]
        %v236 = vld [vmem:[%s215 + $0x30] sm:$0xff]
        %v237 = vld [vmem:[%s215 + $0x38] sm:$0xff]
        %v238 = vmul.f32 %v222, %v222
        %v239 = vmul.f32 %v223, %v223
        %v240 = vmul.f32 %v224, %v224
        %v241 = vmul.f32 %v225, %v225
        %v242 = vmul.f32 %v226, %v226
        %v243 = vmul.f32 %v227, %v227
        %v244 = vmul.f32 %v228, %v228
        %v245 = vmul.f32 %v229, %v229
        %v246 = vmul.f32 %v230, %v230
        %v247 = vmul.f32 %v231, %v231
        %v248 = vmul.f32 %v232, %v232
        %v249 = vmul.f32 %v233, %v233
        %v250 = vmul.f32 %v234, %v234
        %v251 = vmul.f32 %v235, %v235
        %v252 = vmul.f32 %v236, %v236
        %v253 = vmul.f32 %v237, %v237
        %v254 = vmul.f32 %v222, %v230
        %v255 = vmul.f32 %v223, %v231
        %v256 = vmul.f32 %v224, %v232
        %v257 = vmul.f32 %v225, %v233
        %v258 = vmul.f32 %v226, %v234
        %v259 = vmul.f32 %v227, %v235
        %v260 = vmul.f32 %v228, %v236
        %v261 = vmul.f32 %v229, %v237
        %vm262 = vcmask 130048
        %v264 = vsel %vm262, %v222, 0
        %v267 = vsel %vm262, %v223, 0
        %v270 = vsel %vm262, %v224, 0
        %v273 = vsel %vm262, %v225, 0
        %v276 = vsel %vm262, %v226, 0
        %v279 = vsel %vm262, %v227, 0
        %v282 = vsel %vm262, %v228, 0
        %v285 = vsel %vm262, %v229, 0
        %v288 = vsel %vm262, %v230, 0
        %v291 = vsel %vm262, %v231, 0
        %v294 = vsel %vm262, %v232, 0
        %v297 = vsel %vm262, %v233, 0
        %v300 = vsel %vm262, %v234, 0
        %v303 = vsel %vm262, %v235, 0
        %v306 = vsel %vm262, %v236, 0
        %v309 = vsel %vm262, %v237, 0
        %v312 = vsel %vm262, %v238, 0
        %v315 = vsel %vm262, %v239, 0
        %v318 = vsel %vm262, %v240, 0
        %v321 = vsel %vm262, %v241, 0
        %v324 = vsel %vm262, %v242, 0
        %v327 = vsel %vm262, %v243, 0
        %v330 = vsel %vm262, %v244, 0
        %v333 = vsel %vm262, %v245, 0
        %v336 = vsel %vm262, %v246, 0
        %v339 = vsel %vm262, %v247, 0
        %v342 = vsel %vm262, %v248, 0
        %v345 = vsel %vm262, %v249, 0
        %v348 = vsel %vm262, %v250, 0
        %v351 = vsel %vm262, %v251, 0
        %v354 = vsel %vm262, %v252, 0
        %v357 = vsel %vm262, %v253, 0
        %v360 = vsel %vm262, %v254, 0
        %v363 = vsel %vm262, %v255, 0
        %v366 = vsel %vm262, %v256, 0
        %v369 = vsel %vm262, %v257, 0
        %v372 = vsel %vm262, %v258, 0
        %v375 = vsel %vm262, %v259, 0
        %v378 = vsel %vm262, %v260, 0
        %v381 = vsel %vm262, %v261, 0
        %383 = vmatpush.msra.mxu0 0.0
        %384 = vmatpush.msra.mxu0 0.0
        %385 = vmatpush.msra.mxu0 0.0
        %386 = vmatpush.msra.mxu0 0.0
        %387 = vmatpush.msra.mxu0 0.0
        %388 = vmatpush.msra.mxu0 0.0
        %389 = vmatpush.msra.mxu0 0.0
        %390 = vmatpush.msra.mxu0 0.0
        %391 = vmatpush.msra.mxu0 0.0
        %392 = vmatpush.msra.mxu0 0.0
        %393 = vmatpush.msra.mxu0 0.0
        %394 = vmatpush.msra.mxu0 0.0
        %395 = vmatpush.msra.mxu0 0.0
        %396 = vmatpush.msra.mxu0 0.0
        %397 = vmatpush.msra.mxu0 %v217
        %398 = vmatpush.msra.mxu0 %v216
        %399 = vmatmul.f32.gmra.mxu0 %v264
        %v400 = vpop.f32.mrf.mxu0
        %v401 = vadd.f32 0.0, %v400
        %402 = vmatmul.f32.gmra.mxu0 %v267
        %v403 = vpop.f32.mrf.mxu0
        %v404 = vadd.f32 0.0, %v403
        %405 = vmatmul.f32.gmra.mxu0 %v270
        %v406 = vpop.f32.mrf.mxu0
        %v407 = vadd.f32 0.0, %v406
        %408 = vmatmul.f32.gmra.mxu0 %v273
        %v409 = vpop.f32.mrf.mxu0
        %v410 = vadd.f32 0.0, %v409
        %411 = vmatmul.f32.gmra.mxu0 %v276
        %v412 = vpop.f32.mrf.mxu0
        %v413 = vadd.f32 0.0, %v412
        %414 = vmatmul.f32.gmra.mxu0 %v279
        %v415 = vpop.f32.mrf.mxu0
        %v416 = vadd.f32 0.0, %v415
        %417 = vmatmul.f32.gmra.mxu0 %v282
        %v418 = vpop.f32.mrf.mxu0
        %v419 = vadd.f32 0.0, %v418
        %420 = vmatmul.f32.gmra.mxu0 %v285
        %v421 = vpop.f32.mrf.mxu0
        %v422 = vadd.f32 0.0, %v421
        %423 = vmatmul.f32.gmra.mxu0 %v288
        %v424 = vpop.f32.mrf.mxu0
        %v425 = vadd.f32 0.0, %v424
        %426 = vmatmul.f32.gmra.mxu0 %v291
        %v427 = vpop.f32.mrf.mxu0
        %v428 = vadd.f32 0.0, %v427
        %429 = vmatmul.f32.gmra.mxu0 %v294
        %v430 = vpop.f32.mrf.mxu0
        %v431 = vadd.f32 0.0, %v430
        %432 = vmatmul.f32.gmra.mxu0 %v297
        %v433 = vpop.f32.mrf.mxu0
        %v434 = vadd.f32 0.0, %v433
        %435 = vmatmul.f32.gmra.mxu0 %v300
        %v436 = vpop.f32.mrf.mxu0
        %v437 = vadd.f32 0.0, %v436
        %438 = vmatmul.f32.gmra.mxu0 %v303
        %v439 = vpop.f32.mrf.mxu0
        %v440 = vadd.f32 0.0, %v439
        %441 = vmatmul.f32.gmra.mxu0 %v306
        %v442 = vpop.f32.mrf.mxu0
        %v443 = vadd.f32 0.0, %v442
        %444 = vmatmul.f32.gmra.mxu0 %v309
        %v445 = vpop.f32.mrf.mxu0
        %v446 = vadd.f32 0.0, %v445
        %447 = vmatmul.f32.gmra.mxu0 %v312
        %v448 = vpop.f32.mrf.mxu0
        %v449 = vadd.f32 0.0, %v448
        %450 = vmatmul.f32.gmra.mxu0 %v315
        %v451 = vpop.f32.mrf.mxu0
        %v452 = vadd.f32 0.0, %v451
        %453 = vmatmul.f32.gmra.mxu0 %v318
        %v454 = vpop.f32.mrf.mxu0
        %v455 = vadd.f32 0.0, %v454
        %456 = vmatmul.f32.gmra.mxu0 %v321
        %v457 = vpop.f32.mrf.mxu0
        %v458 = vadd.f32 0.0, %v457
        %459 = vmatmul.f32.gmra.mxu0 %v324
        %v460 = vpop.f32.mrf.mxu0
        %v461 = vadd.f32 0.0, %v460
        %462 = vmatmul.f32.gmra.mxu0 %v327
        %v463 = vpop.f32.mrf.mxu0
        %v464 = vadd.f32 0.0, %v463
        %465 = vmatmul.f32.gmra.mxu0 %v330
        %v466 = vpop.f32.mrf.mxu0
        %v467 = vadd.f32 0.0, %v466
        %468 = vmatmul.f32.gmra.mxu0 %v333
        %v469 = vpop.f32.mrf.mxu0
        %v470 = vadd.f32 0.0, %v469
        %471 = vmatmul.f32.gmra.mxu0 %v336
        %v472 = vpop.f32.mrf.mxu0
        %v473 = vadd.f32 0.0, %v472
        %474 = vmatmul.f32.gmra.mxu0 %v339
        %v475 = vpop.f32.mrf.mxu0
        %v476 = vadd.f32 0.0, %v475
        %477 = vmatmul.f32.gmra.mxu0 %v342
        %v478 = vpop.f32.mrf.mxu0
        %v479 = vadd.f32 0.0, %v478
        %480 = vmatmul.f32.gmra.mxu0 %v345
        %v481 = vpop.f32.mrf.mxu0
        %v482 = vadd.f32 0.0, %v481
        %483 = vmatmul.f32.gmra.mxu0 %v348
        %v484 = vpop.f32.mrf.mxu0
        %v485 = vadd.f32 0.0, %v484
        %486 = vmatmul.f32.gmra.mxu0 %v351
        %v487 = vpop.f32.mrf.mxu0
        %v488 = vadd.f32 0.0, %v487
        %489 = vmatmul.f32.gmra.mxu0 %v354
        %v490 = vpop.f32.mrf.mxu0
        %v491 = vadd.f32 0.0, %v490
        %492 = vmatmul.f32.gmra.mxu0 %v357
        %v493 = vpop.f32.mrf.mxu0
        %v494 = vadd.f32 0.0, %v493
        %495 = vmatmul.f32.gmra.mxu0 %v360
        %v496 = vpop.f32.mrf.mxu0
        %v497 = vadd.f32 0.0, %v496
        %498 = vmatmul.f32.gmra.mxu0 %v363
        %v499 = vpop.f32.mrf.mxu0
        %v500 = vadd.f32 0.0, %v499
        %501 = vmatmul.f32.gmra.mxu0 %v366
        %v502 = vpop.f32.mrf.mxu0
        %v503 = vadd.f32 0.0, %v502
        %504 = vmatmul.f32.gmra.mxu0 %v369
        %v505 = vpop.f32.mrf.mxu0
        %v506 = vadd.f32 0.0, %v505
        %507 = vmatmul.f32.gmra.mxu0 %v372
        %v508 = vpop.f32.mrf.mxu0
        %v509 = vadd.f32 0.0, %v508
        %510 = vmatmul.f32.gmra.mxu0 %v375
        %v511 = vpop.f32.mrf.mxu0
        %v512 = vadd.f32 0.0, %v511
        %513 = vmatmul.f32.gmra.mxu0 %v378
        %v514 = vpop.f32.mrf.mxu0
        %v515 = vadd.f32 0.0, %v514
        %516 = vmatmul.f32.gmra.mxu0 %v381
        %v517 = vpop.f32.mrf.mxu0
        %v518 = vadd.f32 0.0, %v517
        %519 = vdwg.mxu0
        %vm520 = vcmask 523264
        %v522 = vsel %vm520, %v218, 0
        %v525 = vsel %vm520, %v219, 0
        %v528 = vsel %vm520, %v220, 0
        %v531 = vsel %vm520, %v221, 0
        %533 = vmatpush.msra.mxu0 0.0
        %534 = vmatpush.msra.mxu0 0.0
        %535 = vmatpush.msra.mxu0 0.0
        %536 = vmatpush.msra.mxu0 0.0
        %537 = vmatpush.msra.mxu0 0.0
        %538 = vmatpush.msra.mxu0 0.0
        %539 = vmatpush.msra.mxu0 0.0
        %540 = vmatpush.msra.mxu0 0.0
        %541 = vmatpush.msra.mxu0 %v422
        %542 = vmatpush.msra.mxu0 %v419
        %543 = vmatpush.msra.mxu0 %v416
        %544 = vmatpush.msra.mxu0 %v413
        %545 = vmatpush.msra.mxu0 %v410
        %546 = vmatpush.msra.mxu0 %v407
        %547 = vmatpush.msra.mxu0 %v404
        %548 = vmatpush.msra.mxu0 %v401
        %549 = vmatmul.f32.gmra.mxu0 %v522
        %v550 = vpop.f32.mrf.mxu0
        %v551 = vadd.f32 0.0, %v550
        %552 = vmatmul.f32.gmra.mxu0 %v525
        %v553 = vpop.f32.mrf.mxu0
        %v554 = vadd.f32 0.0, %v553
        %555 = vmatmul.f32.gmra.mxu0 %v528
        %v556 = vpop.f32.mrf.mxu0
        %v557 = vadd.f32 0.0, %v556
        %558 = vmatmul.f32.gmra.mxu0 %v531
        %v559 = vpop.f32.mrf.mxu0
        %v560 = vadd.f32 0.0, %v559
        %561 = vdwg.mxu0
        %562 = vmatpush.msra.mxu0 0.0
        %563 = vmatpush.msra.mxu0 0.0
        %564 = vmatpush.msra.mxu0 0.0
        %565 = vmatpush.msra.mxu0 0.0
        %566 = vmatpush.msra.mxu0 0.0
        %567 = vmatpush.msra.mxu0 0.0
        %568 = vmatpush.msra.mxu0 0.0
        %569 = vmatpush.msra.mxu0 0.0
        %570 = vmatpush.msra.mxu0 %v446
        %571 = vmatpush.msra.mxu0 %v443
        %572 = vmatpush.msra.mxu0 %v440
        %573 = vmatpush.msra.mxu0 %v437
        %574 = vmatpush.msra.mxu0 %v434
        %575 = vmatpush.msra.mxu0 %v431
        %576 = vmatpush.msra.mxu0 %v428
        %577 = vmatpush.msra.mxu0 %v425
        %578 = vmatmul.f32.gmra.mxu0 %v522
        %v579 = vpop.f32.mrf.mxu0
        %v580 = vadd.f32 0.0, %v579
        %581 = vmatmul.f32.gmra.mxu0 %v525
        %v582 = vpop.f32.mrf.mxu0
        %v583 = vadd.f32 0.0, %v582
        %584 = vmatmul.f32.gmra.mxu0 %v528
        %v585 = vpop.f32.mrf.mxu0
        %v586 = vadd.f32 0.0, %v585
        %587 = vmatmul.f32.gmra.mxu0 %v531
        %v588 = vpop.f32.mrf.mxu0
        %v589 = vadd.f32 0.0, %v588
        %590 = vdwg.mxu0
        %591 = vmatpush.msra.mxu0 0.0
        %592 = vmatpush.msra.mxu0 0.0
        %593 = vmatpush.msra.mxu0 0.0
        %594 = vmatpush.msra.mxu0 0.0
        %595 = vmatpush.msra.mxu0 0.0
        %596 = vmatpush.msra.mxu0 0.0
        %597 = vmatpush.msra.mxu0 0.0
        %598 = vmatpush.msra.mxu0 0.0
        %599 = vmatpush.msra.mxu0 %v470
        %600 = vmatpush.msra.mxu0 %v467
        %601 = vmatpush.msra.mxu0 %v464
        %602 = vmatpush.msra.mxu0 %v461
        %603 = vmatpush.msra.mxu0 %v458
        %604 = vmatpush.msra.mxu0 %v455
        %605 = vmatpush.msra.mxu0 %v452
        %606 = vmatpush.msra.mxu0 %v449
        %607 = vmatmul.f32.gmra.mxu0 %v522
        %v608 = vpop.f32.mrf.mxu0
        %v609 = vadd.f32 0.0, %v608
        %610 = vmatmul.f32.gmra.mxu0 %v525
        %v611 = vpop.f32.mrf.mxu0
        %v612 = vadd.f32 0.0, %v611
        %613 = vmatmul.f32.gmra.mxu0 %v528
        %v614 = vpop.f32.mrf.mxu0
        %v615 = vadd.f32 0.0, %v614
        %616 = vmatmul.f32.gmra.mxu0 %v531
        %v617 = vpop.f32.mrf.mxu0
        %v618 = vadd.f32 0.0, %v617
        %619 = vdwg.mxu0
        %620 = vmatpush.msra.mxu0 0.0
        %621 = vmatpush.msra.mxu0 0.0
        %622 = vmatpush.msra.mxu0 0.0
        %623 = vmatpush.msra.mxu0 0.0
        %624 = vmatpush.msra.mxu0 0.0
        %625 = vmatpush.msra.mxu0 0.0
        %626 = vmatpush.msra.mxu0 0.0
        %627 = vmatpush.msra.mxu0 0.0
        %628 = vmatpush.msra.mxu0 %v494
        %629 = vmatpush.msra.mxu0 %v491
        %630 = vmatpush.msra.mxu0 %v488
        %631 = vmatpush.msra.mxu0 %v485
        %632 = vmatpush.msra.mxu0 %v482
        %633 = vmatpush.msra.mxu0 %v479
        %634 = vmatpush.msra.mxu0 %v476
        %635 = vmatpush.msra.mxu0 %v473
        %636 = vmatmul.f32.gmra.mxu0 %v522
        %v637 = vpop.f32.mrf.mxu0
        %v638 = vadd.f32 0.0, %v637
        %639 = vmatmul.f32.gmra.mxu0 %v525
        %v640 = vpop.f32.mrf.mxu0
        %v641 = vadd.f32 0.0, %v640
        %642 = vmatmul.f32.gmra.mxu0 %v528
        %v643 = vpop.f32.mrf.mxu0
        %v644 = vadd.f32 0.0, %v643
        %645 = vmatmul.f32.gmra.mxu0 %v531
        %v646 = vpop.f32.mrf.mxu0
        %v647 = vadd.f32 0.0, %v646
        %648 = vdwg.mxu0
        %649 = vmatpush.msra.mxu0 0.0
        %650 = vmatpush.msra.mxu0 0.0
        %651 = vmatpush.msra.mxu0 0.0
        %652 = vmatpush.msra.mxu0 0.0
        %653 = vmatpush.msra.mxu0 0.0
        %654 = vmatpush.msra.mxu0 0.0
        %655 = vmatpush.msra.mxu0 0.0
        %656 = vmatpush.msra.mxu0 0.0
        %657 = vmatpush.msra.mxu0 %v518
        %658 = vmatpush.msra.mxu0 %v515
        %659 = vmatpush.msra.mxu0 %v512
        %660 = vmatpush.msra.mxu0 %v509
        %661 = vmatpush.msra.mxu0 %v506
        %662 = vmatpush.msra.mxu0 %v503
        %663 = vmatpush.msra.mxu0 %v500
        %664 = vmatpush.msra.mxu0 %v497
        %665 = vmatmul.f32.gmra.mxu0 %v522
        %v666 = vpop.f32.mrf.mxu0
        %v667 = vadd.f32 0.0, %v666
        %668 = vmatmul.f32.gmra.mxu0 %v525
        %v669 = vpop.f32.mrf.mxu0
        %v670 = vadd.f32 0.0, %v669
        %671 = vmatmul.f32.gmra.mxu0 %v528
        %v672 = vpop.f32.mrf.mxu0
        %v673 = vadd.f32 0.0, %v672
        %674 = vmatmul.f32.gmra.mxu0 %v531
        %v675 = vpop.f32.mrf.mxu0
        %v676 = vadd.f32 0.0, %v675
        %677 = vdwg.mxu0
        %v678 = vmul.f32 %v551, %v551
        %v679 = vmul.f32 %v554, %v554
        %v680 = vmul.f32 %v557, %v557
        %v681 = vmul.f32 %v560, %v560
        %v682 = vmul.f32 %v580, %v580
        %v683 = vmul.f32 %v583, %v583
        %v684 = vmul.f32 %v586, %v586
        %v685 = vmul.f32 %v589, %v589
        %v686 = vmul.f32 %v551, %v580
        %v687 = vmul.f32 %v554, %v583
        %v688 = vmul.f32 %v557, %v586
        %v689 = vmul.f32 %v560, %v589
        %v690 = vsub.f32 %v609, %v678
        %v691 = vsub.f32 %v612, %v679
        %v692 = vsub.f32 %v615, %v680
        %v693 = vsub.f32 %v618, %v681
        %v694 = vsub.f32 %v638, %v682
        %v695 = vsub.f32 %v641, %v683
        %v696 = vsub.f32 %v644, %v684
        %v697 = vsub.f32 %v647, %v685
        %v698 = vsub.f32 %v667, %v686
        %v699 = vsub.f32 %v670, %v687
        %v700 = vsub.f32 %v673, %v688
        %v701 = vsub.f32 %v676, %v689
        %v702 = vmul.f32 %v698, 2.0
        %v703 = vmul.f32 %v699, 2.0
        %v704 = vmul.f32 %v700, 2.0
        %v705 = vmul.f32 %v701, 2.0
        %v706 = vadd.f32 %v702, 0.0009
        %v707 = vadd.f32 %v703, 0.0009
        %v708 = vadd.f32 %v704, 0.0009
        %v709 = vadd.f32 %v705, 0.0009
        %v710 = vadd.f32 %v690, %v694
        %v711 = vadd.f32 %v691, %v695
        %v712 = vadd.f32 %v692, %v696
        %v713 = vadd.f32 %v693, %v697
        %v714 = vadd.f32 %v710, 0.0009
        %v715 = vadd.f32 %v711, 0.0009
        %v716 = vadd.f32 %v712, 0.0009
        %v717 = vadd.f32 %v713, 0.0009
        %v718 = vmul.f32 %v686, 2.0
        %v719 = vmul.f32 %v687, 2.0
        %v720 = vmul.f32 %v688, 2.0
        %v721 = vmul.f32 %v689, 2.0
        %v722 = vadd.f32 %v718, 0.0001
        %v723 = vadd.f32 %v719, 0.0001
        %v724 = vadd.f32 %v720, 0.0001
        %v725 = vadd.f32 %v721, 0.0001
        %v726 = vmul.f32 %v722, %v706
        %v727 = vmul.f32 %v723, %v707
        %v728 = vmul.f32 %v724, %v708
        %v729 = vmul.f32 %v725, %v709
        %v730 = vadd.f32 %v678, %v682
        %v731 = vadd.f32 %v679, %v683
        %v732 = vadd.f32 %v680, %v684
        %v733 = vadd.f32 %v681, %v685
        %v734 = vadd.f32 %v730, 0.0001
        %v735 = vadd.f32 %v731, 0.0001
        %v736 = vadd.f32 %v732, 0.0001
        %v737 = vadd.f32 %v733, 0.0001
        %v738 = vmul.f32 %v734, %v714
        %v739 = vmul.f32 %v735, %v715
        %v740 = vmul.f32 %v736, %v716
        %v741 = vmul.f32 %v737, %v717
        %v742 = vrcp.pop %v738
        %v743 = vmul.f32 %v738, %v742
        %v744 = vsub.f32 1.0, %v743
        %v745 = vmul.f32 %v742, %v744
        %v746 = vadd.f32 %v742, %v745
        %vm747 = vweird.f32 %v738
        %vm748 = vweird.f32 %v742
        %vm749 = vmor %vm747, %vm748
        %v750 = vsel %vm749, %v742, %v746
        %v751 = vand.u32 2147483647, %v738
        %vm752 = vcmp.eq.f32.partialorder %v751, 8.507059e+37
        %v753 = vand.u32 %v738, 2147483648
        %v754 = vor.u32 1.1754944e-38, %v753
        %v755 = vsel %vm752, %v754, %v750
        %v756 = vrcp.pop %v739
        %v757 = vmul.f32 %v739, %v756
        %v758 = vsub.f32 1.0, %v757
        %v759 = vmul.f32 %v756, %v758
        %v760 = vadd.f32 %v756, %v759
        %vm761 = vweird.f32 %v739
        %vm762 = vweird.f32 %v756
        %vm763 = vmor %vm761, %vm762
        %v764 = vsel %vm763, %v756, %v760
        %v765 = vand.u32 2147483647, %v739
        %vm766 = vcmp.eq.f32.partialorder %v765, 8.507059e+37
        %v767 = vand.u32 %v739, 2147483648
        %v768 = vor.u32 1.1754944e-38, %v767
        %v769 = vsel %vm766, %v768, %v764
        %v770 = vrcp.pop %v740
        %v771 = vmul.f32 %v740, %v770
        %v772 = vsub.f32 1.0, %v771
        %v773 = vmul.f32 %v770, %v772
        %v774 = vadd.f32 %v770, %v773
        %vm775 = vweird.f32 %v740
        %vm776 = vweird.f32 %v770
        %vm777 = vmor %vm775, %vm776
        %v778 = vsel %vm777, %v770, %v774
        %v779 = vand.u32 2147483647, %v740
        %vm780 = vcmp.eq.f32.partialorder %v779, 8.507059e+37
        %v781 = vand.u32 %v740, 2147483648
        %v782 = vor.u32 1.1754944e-38, %v781
        %v783 = vsel %vm780, %v782, %v778
        %v784 = vrcp.pop %v741
        %v785 = vmul.f32 %v741, %v784
        %v786 = vsub.f32 1.0, %v785
        %v787 = vmul.f32 %v784, %v786
        %v788 = vadd.f32 %v784, %v787
        %vm789 = vweird.f32 %v741
        %vm790 = vweird.f32 %v784
        %vm791 = vmor %vm789, %vm790
        %v792 = vsel %vm791, %v784, %v788
        %v793 = vand.u32 2147483647, %v741
        %vm794 = vcmp.eq.f32.partialorder %v793, 8.507059e+37
        %v795 = vand.u32 %v741, 2147483648
        %v796 = vor.u32 1.1754944e-38, %v795
        %v797 = vsel %vm794, %v796, %v792
        %v798 = vmul.f32 %v726, %v755
        %v799 = vmul.f32 %v727, %v769
        %v800 = vmul.f32 %v728, %v783
        %v801 = vmul.f32 %v729, %v797
        %v802 = vlaneseq
        %v803 = vshrl.u32 %v802, 7
        %v804 = vadd.s32 %v803, 8
        %v805 = vadd.s32 %v803, 16
        %v806 = vadd.s32 %v803, 24
        %v807 = vlaneseq
        %v808 = vand.u32 %v807, 127
        %vm809 = vcmp.lt.s32.totalorder %v803, 0
        %v810 = vsub.s32 0, %v803
        %v811 = vsel %vm809, %v810, %v803
        %v812 = vshrl.u32 %v811, 3
        %v813 = vand.u32 %v811, 7
        %v814 = vsub.s32 0, %v813
        %v815 = vsel %vm809, %v814, %v813
        %vm816 = vcmp.lt.s32.totalorder %v804, 0
        %v817 = vsub.s32 0, %v804
        %v818 = vsel %vm816, %v817, %v804
        %v819 = vshrl.u32 %v818, 3
        %v820 = vand.u32 %v818, 7
        %v821 = vsub.s32 0, %v820
        %v822 = vsel %vm816, %v821, %v820
        %vm823 = vcmp.lt.s32.totalorder %v805, 0
        %v824 = vsub.s32 0, %v805
        %v825 = vsel %vm823, %v824, %v805
        %v826 = vshrl.u32 %v825, 3
        %v827 = vand.u32 %v825, 7
        %v828 = vsub.s32 0, %v827
        %v829 = vsel %vm823, %v828, %v827
        %vm830 = vcmp.lt.s32.totalorder %v806, 0
        %v831 = vsub.s32 0, %v806
        %v832 = vsel %vm830, %v831, %v806
        %v833 = vshrl.u32 %v832, 3
        %v834 = vand.u32 %v832, 7
        %v835 = vsub.s32 0, %v834
        %v836 = vsel %vm830, %v835, %v834
        %vm837 = vcmp.ne.s32.totalorder %v815, 0
        %vm838 = vcmp.ne.s32.totalorder %v822, 0
        %vm839 = vcmp.ne.s32.totalorder %v829, 0
        %vm840 = vcmp.ne.s32.totalorder %v836, 0
        %vm841 = vcmp.lt.s32.totalorder %v815, 0
        %vm842 = vcmp.lt.s32.totalorder %v822, 0
        %vm843 = vcmp.lt.s32.totalorder %v829, 0
        %vm844 = vcmp.lt.s32.totalorder %v836, 0
        %vm845 = vmand %vm841, %vm837
        %vm846 = vmand %vm842, %vm838
        %vm847 = vmand %vm843, %vm839
        %vm848 = vmand %vm844, %vm840
        %v849 = vadd.s32 %v815, 8
        %v850 = vadd.s32 %v822, 8
        %v851 = vadd.s32 %v829, 8
        %v852 = vadd.s32 %v836, 8
        %v853 = vsel %vm845, %v849, %v815
        %v854 = vsel %vm846, %v850, %v822
        %v855 = vsel %vm847, %v851, %v829
        %v856 = vsel %vm848, %v852, %v836
        %vm857 = vcmp.lt.s32.totalorder %v853, 6
        %vm858 = vcmp.lt.s32.totalorder %v854, 6
        %vm859 = vcmp.lt.s32.totalorder %v855, 6
        %vm860 = vcmp.lt.s32.totalorder %v856, 6
        %vm861 = vcmp.lt.s32.totalorder %v808, 6
        %vm862 = vmand %vm857, %vm861
        %vm863 = vmand %vm858, %vm861
        %vm864 = vmand %vm859, %vm861
        %vm865 = vmand %vm860, %vm861
        %v866 = vsel %vm862, %v798, 0.0
        %v867 = vsel %vm863, %v799, 0.0
        %v868 = vsel %vm864, %v800, 0.0
        %v869 = vsel %vm865, %v801, 0.0
        %v870 = vadd.f32 %v866, %v867
        %v871 = vadd.f32 %v870, %v868
        %v872 = vadd.f32 %v871, %v869
        %873 = vadd.xlane.f32.xlu0 %v872
        %v874 = vpop.xlane.xlu0 %873
        %v875 = vrot.slane %v874, 4
        %v876 = vadd.f32 %v874, %v875
        %v877 = vrot.slane %v876, 2
        %v878 = vadd.f32 %v876, %v877
        %v879 = vrot.slane %v878, 1
        %v880 = vadd.f32 %v878, %v879
        %s881 = vtos %v880
        %s882 = smul.f32 %s881, 0.0069444445
        %v883 = vstv %s882
        %884 = vst [vmem:[%s205] sm:$0xff] %v883
        %s885 = sand.u32 %s120, 1
        %s886 = scalar_lea.sflag [#allocation3], %s885
        %s887 = sand.u32 %s120, 1
        %s888 = smul.addr %s887, 8
        %s889 = scalar_lea.vmem [#allocation2], %s888
        // Predicated region
        $region37: #{tpu_custom_call.1} parent=35 // pred_check
          %p890 = pneg %p130
        $region38: #{tpu_custom_call.1} parent=35 // pred_check_branch
          %892 = sbr.rel (%p890) target = $region40
        $region39: #{tpu_custom_call.1} parent=35 // pred_region
          %894 = vsyncadd %s886, 0
          %s895 = smul.addr %s18, 8
          %s896 = scalar_lea.hbm %s4, %s895
          %s898 = sshll.u32 %s889, 4
          %s899 = int_to_ptr.vmem [resolvable:$true] %s898
          %s900 = sshll.u32 %s896, 4
          %s901 = int_to_ptr.hbm [resolvable:$true] %s900
          %903 = dma.vmem_to_hbm [thread:$0]  %s899, 128, %s901, %s886
        $region40: #{tpu_custom_call.1} parent=35 // pred_fallthru
          _
      $region36: #{tpu_custom_call.1} parent=5 // pred_fallthru
        _
      %p904 = scmp.le.s32.totalorder 2, %s13
      // Predicated region
      $region41: #{tpu_custom_call.1} parent=5 // pred_check
        %p905 = pneg %p904
      $region42: #{tpu_custom_call.1} parent=5 // pred_check_branch
        %907 = sbr.rel (%p905) target = $region44
      $region43: #{tpu_custom_call.1} parent=5 // pred_region
        %s908 = ssub.s32 %s13, 2
        // Predicated region
        $region45: #{tpu_custom_call.1} parent=43 // pred_check
          %p909 = pneg %p136
        $region46: #{tpu_custom_call.1} parent=43 // pred_check_branch
          %911 = sbr.rel (%p909) target = $region48
        $region47: #{tpu_custom_call.1} parent=43 // pred_region
          %s912 = sand.u32 %s121, 1
          %s913 = scalar_lea.sflag [#allocation3], %s912
          %s914 = sand.u32 %s121, 1
          %s915 = smul.addr %s914, 8
          %s916 = scalar_lea.vmem [#allocation2], %s915
          %918 = dma.done %s913, 128
        $region48: #{tpu_custom_call.1} parent=43 // pred_fallthru
          _
      $region44: #{tpu_custom_call.1} parent=5 // pred_fallthru
        _
    $region6: #{tpu_custom_call.1} parent=1 // loop_footer
      %s17 = sadd.s32 1, %s13
    $region7: #{tpu_custom_call.1} parent=1 // loop_footer_branch
      %12 = sbr.rel target = $region3
    $region8: #{tpu_custom_call.1} parent=1 // loop_exit
      _
    %919 = vsyncpa [#allocation3], 1
    %s920 = scalar_lea.sflag [#allocation3], 1
    %921 = vsyncpa %s920, 1

</llo_original>
